<compile_context>
chip_gen: v6e
topology: v6e:2x2x1
jax: 0.10.0
libtpu: 0.0.40
codegen_flags: <defaults>
</compile_context>

<pallas_src>
import jax
import jax.numpy as jnp
from jax.experimental import pallas as pl
from jax.experimental.pallas import tpu as pltpu


def _intent_classifier_kernel(x_ref, w_ref, b_ref, o_ref):
    # x_ref: (TB, D)  w_ref: (N, D)  b_ref: (1, N)  o_ref: (TB, N)
    # Dropout(p=0.0) is the identity, so the hot path is the Linear layer.
    acc = jax.lax.dot_general(
        x_ref[...], w_ref[...],
        dimension_numbers=(((1,), (1,)), ((), ())),   # contract on D, no transpose needed
        preferred_element_type=jnp.float32)
    o_ref[...] = (acc + b_ref[...]).astype(o_ref.dtype)


def intent_classifier(x, weight, bias, *, tile_b=None, operand_dtype=None):
    """Forward pass of IntentClassifier.

    x:      [B, D]
    weight: [N, D]   (PyTorch nn.Linear layout, consumed as-is: no transpose)
    bias:   [N]
    returns [B, N] in x.dtype
    """
    B, D = x.shape
    N, D_w = weight.shape
    assert D == D_w, (x.shape, weight.shape)
    out_dtype = x.dtype

    if operand_dtype is not None:
        # bf16 matmul operands; accumulation, bias add and output stay f32.
        x = x.astype(operand_dtype)
        weight = weight.astype(operand_dtype)
    b2 = bias.astype(jnp.float32).reshape(1, N)

    # Batch tile: single step for small B (overhead-bound regime); MXU-aligned
    # multi-step tiles for large B so v7x can shard the parallel axis across
    # its two TensorCores and v6e gets roofline-friendly 256/512-row tiles.
    if tile_b is None:
        if B <= 256:
            tile_b = B
        elif B >= 1024:
            tile_b = 512
        else:
            tile_b = 256

    # Lane-dense output: with N < 128 every store is mostly masked. Once the
    # batch is big enough for stores to matter, zero-pad N up to a multiple of
    # 128 (padded weight rows / bias lanes are zero -> exact; sliced off below).
    n_out = N
    if B >= 512 and N % 128 != 0:
        n_out = 128 * pl.cdiv(N, 128)
        weight = jnp.pad(weight, ((0, n_out - N), (0, 0)))
        b2 = jnp.pad(b2, ((0, 0), (0, n_out - N)))

    grid = (pl.cdiv(B, tile_b),)

    def run(single_buffer_params):
        res_kwargs = {}
        if single_buffer_params and hasattr(pl, "Buffered"):
            # Weight/bias blocks never change across the grid: one buffer each
            # instead of the default double buffer (halves their VMEM cost).
            res_kwargs = dict(pipeline_mode=pl.Buffered(1))
        return pl.pallas_call(
            _intent_classifier_kernel,
            out_shape=jax.ShapeDtypeStruct((B, n_out), out_dtype),
            grid_spec=pltpu.PrefetchScalarGridSpec(
                num_scalar_prefetch=0,
                grid=grid,
                in_specs=[
                    pl.BlockSpec((tile_b, D), lambda i: (i, 0)),
                    pl.BlockSpec((n_out, D), lambda i: (0, 0), **res_kwargs),
                    pl.BlockSpec((1, n_out), lambda i: (0, 0), **res_kwargs),
                ],
                out_specs=pl.BlockSpec((tile_b, n_out), lambda i: (i, 0)),
            ),
            compiler_params=pltpu.CompilerParams(
                dimension_semantics=("parallel",)),
        )(x, weight, b2)

    try:
        out = run(True)
    except Exception:  # pl.Buffered(1) not supported by this jax build -> plain specs
        out = run(False)

    if n_out != N:
        out = out[:, :N]
    return out


if __name__ == "__main__":
    # Shapes consistent with the module: batch=8, input_dim=32, num_intent_labels=16.
    B, D, N = 8, 32, 16

    key = jax.random.PRNGKey(0)
    kx, kw, kb = jax.random.split(key, 3)

    x = jax.random.normal(kx, (B, D), dtype=jnp.float32)
    bound = 1.0 / (D ** 0.5)
    weight = jax.random.uniform(kw, (N, D), dtype=jnp.float32, minval=-bound, maxval=bound)
    bias = jax.random.uniform(kb, (N,), dtype=jnp.float32, minval=-bound, maxval=bound)

    # Reference (dropout p=0.0 is identity).
    ref = x @ weight.T + bias

    # 1) f32 path at native (tiny) shapes: single grid step, no transpose.
    out = jax.block_until_ready(intent_classifier(x, weight, bias))
    assert out.shape == (B, N)
    assert jnp.allclose(out, ref, atol=1e-3, rtol=1e-3)

    # 2) bf16-operand path (f32 accumulation / bias add / output).
    out_bf16 = jax.block_until_ready(
        intent_classifier(x, weight, bias, operand_dtype=jnp.bfloat16))
    assert out_bf16.shape == (B, N)
    assert jnp.allclose(out_bf16, ref, atol=5e-2, rtol=5e-2)

    # 3) Large-batch path: multi-step MXU-aligned tiles, lane-dense (padded-N)
    #    output, ragged final block.
    B_big = 640
    x_big = jax.random.normal(jax.random.PRNGKey(1), (B_big, D), dtype=jnp.float32)
    out_big = jax.block_until_ready(intent_classifier(x_big, weight, bias))
    ref_big = x_big @ weight.T + bias
    assert out_big.shape == (B_big, N)
    assert jnp.allclose(out_big, ref_big, atol=1e-3, rtol=1e-3)

    print("KERNEL_OK")
</pallas_src>

<mosaic_0001>
module attributes {stable_mosaic.version = 11 : i64} {
  func.func @_intent_classifier_kernel(%arg0: i32, %arg1: memref<8x32xf32, #tpu.memory_space<vmem>>, %arg2: memref<16x32xf32, #tpu.memory_space<vmem>>, %arg3: memref<1x16xf32, #tpu.memory_space<vmem>>, %arg4: memref<8x16xf32, #tpu.memory_space<vmem>>) attributes {dimension_semantics = [#tpu.dimension_semantics<parallel>], iteration_bounds = array<i64: 1>, scalar_prefetch = 0 : i64, scratch_operands = 0 : i64, tpu.core_type = #tpu.core_type<tc>, window_params = [{transform_indices = @transform_0, window_bounds = array<i64: 8, 32>}, {pipeline_mode = #tpu.pipeline_mode<synchronous>, transform_indices = @transform_1, window_bounds = array<i64: 16, 32>}, {pipeline_mode = #tpu.pipeline_mode<synchronous>, transform_indices = @transform_2, window_bounds = array<i64: 1, 16>}, {transform_indices = @transform_3, window_bounds = array<i64: 8, 16>}]} {
    %c0 = arith.constant 0 : index
    %c0_0 = arith.constant 0 : index
    %0 = vector.load %arg1[%c0, %c0_0] : memref<8x32xf32, #tpu.memory_space<vmem>>, vector<8x32xf32>
    %c0_1 = arith.constant 0 : index
    %c0_2 = arith.constant 0 : index
    %1 = vector.load %arg2[%c0_1, %c0_2] : memref<16x32xf32, #tpu.memory_space<vmem>>, vector<16x32xf32>
    %cst = arith.constant dense<0.000000e+00> : vector<8x16xf32>
    %2 = tpu.matmul %0, %1, %cst {dimension_numbers = #tpu.dot_dimension_numbers<[1], [1], [0], [0], [0, 0, 1, 0], [], []>} : vector<8x32xf32>, vector<16x32xf32>, vector<8x16xf32> -> vector<8x16xf32>
    %c0_3 = arith.constant 0 : index
    %c0_4 = arith.constant 0 : index
    %3 = vector.load %arg3[%c0_3, %c0_4] : memref<1x16xf32, #tpu.memory_space<vmem>>, vector<1x16xf32>
    %4 = vector.broadcast %3 : vector<1x16xf32> to vector<8x16xf32>
    %5 = arith.addf %2, %4 : vector<8x16xf32>
    %c0_5 = arith.constant 0 : index
    %c0_6 = arith.constant 0 : index
    %6 = vector.load %arg4[%c0_5, %c0_6] : memref<8x16xf32, #tpu.memory_space<vmem>>, vector<8x16xf32>
    tpu.vector_store %arg4[%c0_5, %c0_6], %5 {strides = array<i32>} : memref<8x16xf32, #tpu.memory_space<vmem>>, vector<8x16xf32>,
    return
  }
  func.func @transform_0(%arg0: i32) -> (i32, i32) {
    %c0_i32 = arith.constant 0 : i32
    %c0_i32_0 = arith.constant 0 : i32
    return %arg0, %c0_i32 : i32, i32
  }
  func.func @transform_1(%arg0: i32) -> (i32, i32) {
    %c0_i32 = arith.constant 0 : i32
    %c0_i32_0 = arith.constant 0 : i32
    %c0_i32_1 = arith.constant 0 : i32
    return %c0_i32, %c0_i32_0 : i32, i32
  }
  func.func @transform_2(%arg0: i32) -> (i32, i32) {
    %c0_i32 = arith.constant 0 : i32
    %c0_i32_0 = arith.constant 0 : i32
    %c0_i32_1 = arith.constant 0 : i32
    return %c0_i32, %c0_i32_0 : i32, i32
  }
  func.func @transform_3(%arg0: i32) -> (i32, i32) {
    %c0_i32 = arith.constant 0 : i32
    %c0_i32_0 = arith.constant 0 : i32
    return %arg0, %c0_i32 : i32, i32
  }
}

module attributes {stable_mosaic.version = 11 : i64} {
  func.func @_intent_classifier_kernel(%arg0: i32, %arg1: memref<8x32xf32, #tpu.memory_space<vmem>>, %arg2: memref<16x32xf32, #tpu.memory_space<vmem>>, %arg3: memref<1x16xf32, #tpu.memory_space<vmem>>, %arg4: memref<8x16xf32, #tpu.memory_space<vmem>>) attributes {dimension_semantics = [#tpu.dimension_semantics<parallel>], iteration_bounds = array<i64: 1>, scalar_prefetch = 0 : i64, scratch_operands = 0 : i64, tpu.core_type = #tpu.core_type<tc>, window_params = [{transform_indices = @transform_0, window_bounds = array<i64: 8, 32>}, {pipeline_mode = #tpu.pipeline_mode<synchronous>, transform_indices = @transform_1, window_bounds = array<i64: 16, 32>}, {pipeline_mode = #tpu.pipeline_mode<synchronous>, transform_indices = @transform_2, window_bounds = array<i64: 1, 16>}, {transform_indices = @transform_3, window_bounds = array<i64: 8, 16>}]} {
    %c0 = arith.constant 0 : index
    %c0_0 = arith.constant 0 : index
    %0 = vector.load %arg1[%c0, %c0_0] : memref<8x32xf32, #tpu.memory_space<vmem>>, vector<8x32xf32>
    %c0_1 = arith.constant 0 : index
    %c0_2 = arith.constant 0 : index
    %1 = vector.load %arg2[%c0_1, %c0_2] : memref<16x32xf32, #tpu.memory_space<vmem>>, vector<16x32xf32>
    %cst = arith.constant dense<0.000000e+00> : vector<8x16xf32>
    %2 = tpu.matmul %0, %1, %cst {dimension_numbers = #tpu.dot_dimension_numbers<[1], [1], [0], [0], [0, 0, 1, 0], [], []>} : vector<8x32xf32>, vector<16x32xf32>, vector<8x16xf32> -> vector<8x16xf32>
    %c0_3 = arith.constant 0 : index
    %c0_4 = arith.constant 0 : index
    %3 = vector.load %arg3[%c0_3, %c0_4] : memref<1x16xf32, #tpu.memory_space<vmem>>, vector<1x16xf32>
    %4 = vector.broadcast %3 : vector<1x16xf32> to vector<8x16xf32>
    %5 = arith.addf %2, %4 : vector<8x16xf32>
    %c0_5 = arith.constant 0 : index
    %c0_6 = arith.constant 0 : index
    %6 = vector.load %arg4[%c0_5, %c0_6] : memref<8x16xf32, #tpu.memory_space<vmem>>, vector<8x16xf32>
    tpu.vector_store %arg4[%c0_5, %c0_6], %5 {strides = array<i32>} : memref<8x16xf32, #tpu.memory_space<vmem>>, vector<8x16xf32>,
    return
  }
  func.func @transform_0(%arg0: i32) -> (i32, i32) {
    %c0_i32 = arith.constant 0 : i32
    %c0_i32_0 = arith.constant 0 : i32
    return %arg0, %c0_i32 : i32, i32
  }
  func.func @transform_1(%arg0: i32) -> (i32, i32) {
    %c0_i32 = arith.constant 0 : i32
    %c0_i32_0 = arith.constant 0 : i32
    %c0_i32_1 = arith.constant 0 : i32
    return %c0_i32, %c0_i32_0 : i32, i32
  }
  func.func @transform_2(%arg0: i32) -> (i32, i32) {
    %c0_i32 = arith.constant 0 : i32
    %c0_i32_0 = arith.constant 0 : i32
    %c0_i32_1 = arith.constant 0 : i32
    return %c0_i32, %c0_i32_0 : i32, i32
  }
  func.func @transform_3(%arg0: i32) -> (i32, i32) {
    %c0_i32 = arith.constant 0 : i32
    %c0_i32_0 = arith.constant 0 : i32
    return %arg0, %c0_i32 : i32, i32
  }
}

</mosaic_0001>

<llo_original>
// kernel: tpu_custom_call.1
$region0: #{tpu_custom_call.1}
  #allocation0 [shape = 'u32[]', space=smem, size = 0x4, offset = 0x4, fixed_abs, tag = 'smem constant byte address 0x4 - core index']
  #allocation1 [shape = 'u32[144,128]{1,0:T(1,128)}', space=vmem, size = 0x12000, scoped, tag = 'internal scratch']
  %s0 = inlined_call_operand.hbm [shape: f32[8,32], index: 0, kind: input, shape index: {}]
  %s1 = inlined_call_operand.hbm [shape: f32[16,32], index: 1, kind: input, shape index: {}]
  %s2 = inlined_call_operand.vmem [shape: f32[1,16], index: 2, kind: input, shape index: {}]
  %s3 = inlined_call_operand.hbm [shape: f32[8,16], index: 3, kind: output, shape index: {}]
  %s4 = sld [smem:[#allocation0]]
  $region30: #{tpu_custom_call.1} parent=0
    _
  %s6 = ssub.s32 1, %s4
  %s7 = scalar_select 0, %s6, %s4
  $region1: #{tpu_custom_call.1} parent=0
    #allocation2 [shape = 'u8[4096]{0}', space=vmem, size = 0x1000, scoped, tag = 'input window, operand 0, single buffered']
    #allocation3 [shape = 's32[1]{0}', space=sflag, size = 0x4, scoped, tag = 'scoped memory for tpu_custom_call.1']
    #allocation4 [shape = 's32[1]{0}', space=sflag, size = 0x4, scoped, tag = 'scoped memory for tpu_custom_call.1']
    #allocation5 [shape = 'u8[8192]{0}', space=vmem, size = 0x2000, scoped, tag = 'input window, operand 1, single buffered']
    #allocation6 [shape = 's32[1]{0}', space=sflag, size = 0x4, scoped, tag = 'scoped memory for tpu_custom_call.1']
    #allocation7 [shape = 'u8[4096]{0}', space=vmem, size = 0x1000, scoped, tag = 'output window, operand 0, single buffered']
    %8 = vsyncpa [#allocation3], 0
    %9 = vsyncpa [#allocation6], 0
    %10 = vsyncpa [#allocation4], 0
    // Predicated region
    $region2: #{tpu_custom_call.1} parent=1 // pred_check
      _
    $region3: #{tpu_custom_call.1} parent=1 // pred_check_branch
      %12 = sbr.rel (0) target = $region5
    $region4: #{tpu_custom_call.1} parent=1 // pred_region
      %s14 = ssub.s32 128, 128
      %15 = vsyncadd [#allocation3], %s14
      %s17 = sshll.u32 [#allocation2], 4
      %s18 = int_to_ptr.vmem [resolvable:$true] %s17
      %20 = dma.hbm_to_vmem [thread:$0]  %s0, 128, %s18, [#allocation3]
    $region5: #{tpu_custom_call.1} parent=1 // pred_fallthru
      _
    // Predicated region
    $region6: #{tpu_custom_call.1} parent=1 // pred_check
      _
    $region7: #{tpu_custom_call.1} parent=1 // pred_check_branch
      %22 = sbr.rel (0) target = $region9
    $region8: #{tpu_custom_call.1} parent=1 // pred_region
      %s24 = ssub.s32 256, 256
      %25 = vsyncadd [#allocation6], %s24
      %s26 = sshll.u32 [#allocation5], 4
      %s27 = int_to_ptr.vmem [resolvable:$true] %s26
      %32 = dma.hbm_to_vmem [thread:$0]  %s1, 256, %s27, [#allocation6], 128, 128, 8
    $region9: #{tpu_custom_call.1} parent=1 // pred_fallthru
      _
    // Predicated region
    $region10: #{tpu_custom_call.1} parent=1 // pred_check
      _
    $region11: #{tpu_custom_call.1} parent=1 // pred_check_branch
      %34 = sbr.rel (0) target = $region13
    $region12: #{tpu_custom_call.1} parent=1 // pred_region
      _
    $region13: #{tpu_custom_call.1} parent=1 // pred_fallthru
      _
    // Predicated region
    $region14: #{tpu_custom_call.1} parent=1 // pred_check
      _
    $region15: #{tpu_custom_call.1} parent=1 // pred_check_branch
      %36 = sbr.rel (0) target = $region17
    $region16: #{tpu_custom_call.1} parent=1 // pred_region
      %37 = dma.done [#allocation3], 128
    $region17: #{tpu_custom_call.1} parent=1 // pred_fallthru
      _
    // Predicated region
    $region18: #{tpu_custom_call.1} parent=1 // pred_check
      _
    $region19: #{tpu_custom_call.1} parent=1 // pred_check_branch
      %39 = sbr.rel (0) target = $region21
    $region20: #{tpu_custom_call.1} parent=1 // pred_region
      %40 = dma.done [#allocation6], 256
    $region21: #{tpu_custom_call.1} parent=1 // pred_fallthru
      _
    %v41 = vld [vmem:[#allocation2] sm:$0xff]
    %v42 = vld [vmem:[#allocation5] sm:$0xff]
    %v43 = vld [vmem:[#allocation5 + $0x8] sm:$0xff]
    %v44 = vld [vmem:[%s2] sm:$0x1]
    %v46 = vlaneseq
    %v47 = vshrl.u32 %v46, 7
    %v48 = vsub.s32 0, %v47
    %v49 = vrot.slane %v44, %v48
    %vm51 = vcmask 261120
    %v53 = vsel %vm51, %v41, 0
    %v56 = vsel %vm51, %v42, 0
    %v59 = vsel %vm51, %v43, 0
    %61 = vmatprep.subr.mxu0 0.0
    %62 = vmatpush1.xpose.msra.mxu0 0.0
    %63 = vmatprep.subr.mxu0 0.0
    %64 = vmatpush1.xpose.msra.mxu0 0.0
    %65 = vmatprep.subr.mxu0 0.0
    %66 = vmatpush1.xpose.msra.mxu0 0.0
    %67 = vmatprep.subr.mxu0 0.0
    %68 = vmatpush1.xpose.msra.mxu0 0.0
    %69 = vmatprep.subr.mxu0 0.0
    %70 = vmatpush1.xpose.msra.mxu0 0.0
    %71 = vmatprep.subr.mxu0 0.0
    %72 = vmatpush1.xpose.msra.mxu0 0.0
    %73 = vmatprep.subr.mxu0 0.0
    %74 = vmatpush1.xpose.msra.mxu0 0.0
    %75 = vmatprep.subr.mxu0 0.0
    %76 = vmatpush1.xpose.msra.mxu0 0.0
    %77 = vmatprep.subr.mxu0 0.0
    %78 = vmatpush1.xpose.msra.mxu0 0.0
    %79 = vmatprep.subr.mxu0 0.0
    %80 = vmatpush1.xpose.msra.mxu0 0.0
    %81 = vmatprep.subr.mxu0 0.0
    %82 = vmatpush1.xpose.msra.mxu0 0.0
    %83 = vmatprep.subr.mxu0 0.0
    %84 = vmatpush1.xpose.msra.mxu0 0.0
    %85 = vmatprep.subr.mxu0 0.0
    %86 = vmatpush1.xpose.msra.mxu0 0.0
    %87 = vmatprep.subr.mxu0 0.0
    %88 = vmatpush1.xpose.msra.mxu0 0.0
    %89 = vmatprep.subr.mxu0 0.0
    %90 = vmatpush1.xpose.msra.mxu0 %v59
    %91 = vmatprep.subr.mxu0 0.0
    %92 = vmatpush1.xpose.msra.mxu0 %v56
    %93 = vmatprep.subr.mxu0 0.0
    %94 = vmatpush2.xpose.msra.mxu0 0.0
    %95 = vmatprep.subr.mxu0 0.0
    %96 = vmatpush2.xpose.msra.mxu0 0.0
    %97 = vmatprep.subr.mxu0 0.0
    %98 = vmatpush2.xpose.msra.mxu0 0.0
    %99 = vmatprep.subr.mxu0 0.0
    %100 = vmatpush2.xpose.msra.mxu0 0.0
    %101 = vmatprep.subr.mxu0 0.0
    %102 = vmatpush2.xpose.msra.mxu0 0.0
    %103 = vmatprep.subr.mxu0 0.0
    %104 = vmatpush2.xpose.msra.mxu0 0.0
    %105 = vmatprep.subr.mxu0 0.0
    %106 = vmatpush2.xpose.msra.mxu0 0.0
    %107 = vmatprep.subr.mxu0 0.0
    %108 = vmatpush2.xpose.msra.mxu0 0.0
    %109 = vmatprep.subr.mxu0 0.0
    %110 = vmatpush2.xpose.msra.mxu0 0.0
    %111 = vmatprep.subr.mxu0 0.0
    %112 = vmatpush2.xpose.msra.mxu0 0.0
    %113 = vmatprep.subr.mxu0 0.0
    %114 = vmatpush2.xpose.msra.mxu0 0.0
    %115 = vmatprep.subr.mxu0 0.0
    %116 = vmatpush2.xpose.msra.mxu0 0.0
    %117 = vmatprep.subr.mxu0 0.0
    %118 = vmatpush2.xpose.msra.mxu0 0.0
    %119 = vmatprep.subr.mxu0 0.0
    %120 = vmatpush2.xpose.msra.mxu0 0.0
    %121 = vmatprep.subr.mxu0 0.0
    %122 = vmatpush2.xpose.msra.mxu0 0.0
    %123 = vmatprep.subr.mxu0 0.0
    %124 = vmatpush2.xpose.msra.mxu0 0.0
    %125 = vmatprep.mubr.f32.mxu0 0.0
    %126 = vmatmul.mubr.f32.gmra.mxu0 %v53
    %v127 = vpop.f32.mrf.mxu0
    %v128 = vadd.f32 %v49, %v127
    %v129 = vpop.f32.mrf.mxu0
    %130 = vdwg.mxu0
    %vm131 = vcmask 130048
    %132 = vst.msk [vmem:[#allocation7] sm:$0xff] %vm131, %v128
    // Predicated region
    $region22: #{tpu_custom_call.1} parent=1 // pred_check
      _
    $region23: #{tpu_custom_call.1} parent=1 // pred_check_branch
      %134 = sbr.rel (0) target = $region25
    $region24: #{tpu_custom_call.1} parent=1 // pred_region
      %s136 = ssub.s32 128, 128
      %137 = vsyncadd [#allocation4], %s136
      %s139 = sshll.u32 [#allocation7], 4
      %s140 = int_to_ptr.vmem [resolvable:$true] %s139
      %142 = dma.vmem_to_hbm [thread:$0]  %s140, 128, %s3, [#allocation4]
    $region25: #{tpu_custom_call.1} parent=1 // pred_fallthru
      _
    // Predicated region
    $region26: #{tpu_custom_call.1} parent=1 // pred_check
      _
    $region27: #{tpu_custom_call.1} parent=1 // pred_check_branch
      %144 = sbr.rel (0) target = $region29
    $region28: #{tpu_custom_call.1} parent=1 // pred_region
      %145 = dma.done [#allocation4], 128
    $region29: #{tpu_custom_call.1} parent=1 // pred_fallthru
      _
    %146 = vsyncpa [#allocation3], 1
    %147 = vsyncpa [#allocation6], 1
    %148 = vsyncpa [#allocation4], 1

// kernel: tpu_custom_call.1
$region0: #{tpu_custom_call.1}
  #allocation0 [shape = 'u32[]', space=smem, size = 0x4, offset = 0x4, fixed_abs, tag = 'smem constant byte address 0x4 - core index']
  #allocation1 [shape = 'u32[144,128]{1,0:T(1,128)}', space=vmem, size = 0x12000, scoped, tag = 'internal scratch']
  %s0 = inlined_call_operand.hbm [shape: f32[8,32], index: 0, kind: input, shape index: {}]
  %s1 = inlined_call_operand.hbm [shape: f32[16,32], index: 1, kind: input, shape index: {}]
  %s2 = inlined_call_operand.vmem [shape: f32[1,16], index: 2, kind: input, shape index: {}]
  %s3 = inlined_call_operand.hbm [shape: f32[8,16], index: 3, kind: output, shape index: {}]
  %s4 = sld [smem:[#allocation0]]
  $region30: #{tpu_custom_call.1} parent=0
    _
  %s6 = ssub.s32 1, %s4
  %s7 = scalar_select 0, %s6, %s4
  $region1: #{tpu_custom_call.1} parent=0
    #allocation2 [shape = 'u8[4096]{0}', space=vmem, size = 0x1000, scoped, tag = 'input window, operand 0, single buffered']
    #allocation3 [shape = 's32[1]{0}', space=sflag, size = 0x4, scoped, tag = 'scoped memory for tpu_custom_call.1']
    #allocation4 [shape = 's32[1]{0}', space=sflag, size = 0x4, scoped, tag = 'scoped memory for tpu_custom_call.1']
    #allocation5 [shape = 'u8[8192]{0}', space=vmem, size = 0x2000, scoped, tag = 'input window, operand 1, single buffered']
    #allocation6 [shape = 's32[1]{0}', space=sflag, size = 0x4, scoped, tag = 'scoped memory for tpu_custom_call.1']
    #allocation7 [shape = 'u8[4096]{0}', space=vmem, size = 0x1000, scoped, tag = 'output window, operand 0, single buffered']
    %8 = vsyncpa [#allocation3], 0
    %9 = vsyncpa [#allocation6], 0
    %10 = vsyncpa [#allocation4], 0
    // Predicated region
    $region2: #{tpu_custom_call.1} parent=1 // pred_check
      _
    $region3: #{tpu_custom_call.1} parent=1 // pred_check_branch
      %12 = sbr.rel (0) target = $region5
    $region4: #{tpu_custom_call.1} parent=1 // pred_region
      %s14 = ssub.s32 128, 128
      %15 = vsyncadd [#allocation3], %s14
      %s17 = sshll.u32 [#allocation2], 4
      %s18 = int_to_ptr.vmem [resolvable:$true] %s17
      %20 = dma.hbm_to_vmem [thread:$0]  %s0, 128, %s18, [#allocation3]
    $region5: #{tpu_custom_call.1} parent=1 // pred_fallthru
      _
    // Predicated region
    $region6: #{tpu_custom_call.1} parent=1 // pred_check
      _
    $region7: #{tpu_custom_call.1} parent=1 // pred_check_branch
      %22 = sbr.rel (0) target = $region9
    $region8: #{tpu_custom_call.1} parent=1 // pred_region
      %s24 = ssub.s32 256, 256
      %25 = vsyncadd [#allocation6], %s24
      %s26 = sshll.u32 [#allocation5], 4
      %s27 = int_to_ptr.vmem [resolvable:$true] %s26
      %32 = dma.hbm_to_vmem [thread:$0]  %s1, 256, %s27, [#allocation6], 128, 128, 8
    $region9: #{tpu_custom_call.1} parent=1 // pred_fallthru
      _
    // Predicated region
    $region10: #{tpu_custom_call.1} parent=1 // pred_check
      _
    $region11: #{tpu_custom_call.1} parent=1 // pred_check_branch
      %34 = sbr.rel (0) target = $region13
    $region12: #{tpu_custom_call.1} parent=1 // pred_region
      _
    $region13: #{tpu_custom_call.1} parent=1 // pred_fallthru
      _
    // Predicated region
    $region14: #{tpu_custom_call.1} parent=1 // pred_check
      _
    $region15: #{tpu_custom_call.1} parent=1 // pred_check_branch
      %36 = sbr.rel (0) target = $region17
    $region16: #{tpu_custom_call.1} parent=1 // pred_region
      %37 = dma.done [#allocation3], 128
    $region17: #{tpu_custom_call.1} parent=1 // pred_fallthru
      _
    // Predicated region
    $region18: #{tpu_custom_call.1} parent=1 // pred_check
      _
    $region19: #{tpu_custom_call.1} parent=1 // pred_check_branch
      %39 = sbr.rel (0) target = $region21
    $region20: #{tpu_custom_call.1} parent=1 // pred_region
      %40 = dma.done [#allocation6], 256
    $region21: #{tpu_custom_call.1} parent=1 // pred_fallthru
      _
    %v41 = vld [vmem:[#allocation2] sm:$0xff]
    %v42 = vld [vmem:[#allocation5] sm:$0xff]
    %v43 = vld [vmem:[#allocation5 + $0x8] sm:$0xff]
    %v44 = vld [vmem:[%s2] sm:$0x1]
    %v46 = vlaneseq
    %v47 = vshrl.u32 %v46, 7
    %v48 = vsub.s32 0, %v47
    %v49 = vrot.slane %v44, %v48
    %vm51 = vcmask 261120
    %v53 = vsel %vm51, %v41, 0
    %v56 = vsel %vm51, %v42, 0
    %v59 = vsel %vm51, %v43, 0
    %61 = vmatprep.subr.mxu0 0.0
    %62 = vmatpush1.xpose.msra.mxu0 0.0
    %63 = vmatprep.subr.mxu0 0.0
    %64 = vmatpush1.xpose.msra.mxu0 0.0
    %65 = vmatprep.subr.mxu0 0.0
    %66 = vmatpush1.xpose.msra.mxu0 0.0
    %67 = vmatprep.subr.mxu0 0.0
    %68 = vmatpush1.xpose.msra.mxu0 0.0
    %69 = vmatprep.subr.mxu0 0.0
    %70 = vmatpush1.xpose.msra.mxu0 0.0
    %71 = vmatprep.subr.mxu0 0.0
    %72 = vmatpush1.xpose.msra.mxu0 0.0
    %73 = vmatprep.subr.mxu0 0.0
    %74 = vmatpush1.xpose.msra.mxu0 0.0
    %75 = vmatprep.subr.mxu0 0.0
    %76 = vmatpush1.xpose.msra.mxu0 0.0
    %77 = vmatprep.subr.mxu0 0.0
    %78 = vmatpush1.xpose.msra.mxu0 0.0
    %79 = vmatprep.subr.mxu0 0.0
    %80 = vmatpush1.xpose.msra.mxu0 0.0
    %81 = vmatprep.subr.mxu0 0.0
    %82 = vmatpush1.xpose.msra.mxu0 0.0
    %83 = vmatprep.subr.mxu0 0.0
    %84 = vmatpush1.xpose.msra.mxu0 0.0
    %85 = vmatprep.subr.mxu0 0.0
    %86 = vmatpush1.xpose.msra.mxu0 0.0
    %87 = vmatprep.subr.mxu0 0.0
    %88 = vmatpush1.xpose.msra.mxu0 0.0
    %89 = vmatprep.subr.mxu0 0.0
    %90 = vmatpush1.xpose.msra.mxu0 %v59
    %91 = vmatprep.subr.mxu0 0.0
    %92 = vmatpush1.xpose.msra.mxu0 %v56
    %93 = vmatprep.subr.mxu0 0.0
    %94 = vmatpush2.xpose.msra.mxu0 0.0
    %95 = vmatprep.subr.mxu0 0.0
    %96 = vmatpush2.xpose.msra.mxu0 0.0
    %97 = vmatprep.subr.mxu0 0.0
    %98 = vmatpush2.xpose.msra.mxu0 0.0
    %99 = vmatprep.subr.mxu0 0.0
    %100 = vmatpush2.xpose.msra.mxu0 0.0
    %101 = vmatprep.subr.mxu0 0.0
    %102 = vmatpush2.xpose.msra.mxu0 0.0
    %103 = vmatprep.subr.mxu0 0.0
    %104 = vmatpush2.xpose.msra.mxu0 0.0
    %105 = vmatprep.subr.mxu0 0.0
    %106 = vmatpush2.xpose.msra.mxu0 0.0
    %107 = vmatprep.subr.mxu0 0.0
    %108 = vmatpush2.xpose.msra.mxu0 0.0
    %109 = vmatprep.subr.mxu0 0.0
    %110 = vmatpush2.xpose.msra.mxu0 0.0
    %111 = vmatprep.subr.mxu0 0.0
    %112 = vmatpush2.xpose.msra.mxu0 0.0
    %113 = vmatprep.subr.mxu0 0.0
    %114 = vmatpush2.xpose.msra.mxu0 0.0
    %115 = vmatprep.subr.mxu0 0.0
    %116 = vmatpush2.xpose.msra.mxu0 0.0
    %117 = vmatprep.subr.mxu0 0.0
    %118 = vmatpush2.xpose.msra.mxu0 0.0
    %119 = vmatprep.subr.mxu0 0.0
    %120 = vmatpush2.xpose.msra.mxu0 0.0
    %121 = vmatprep.subr.mxu0 0.0
    %122 = vmatpush2.xpose.msra.mxu0 0.0
    %123 = vmatprep.subr.mxu0 0.0
    %124 = vmatpush2.xpose.msra.mxu0 0.0
    %125 = vmatprep.mubr.f32.mxu0 0.0
    %126 = vmatmul.mubr.f32.gmra.mxu0 %v53
    %v127 = vpop.f32.mrf.mxu0
    %v128 = vadd.f32 %v49, %v127
    %v129 = vpop.f32.mrf.mxu0
    %130 = vdwg.mxu0
    %vm131 = vcmask 130048
    %132 = vst.msk [vmem:[#allocation7] sm:$0xff] %vm131, %v128
    // Predicated region
    $region22: #{tpu_custom_call.1} parent=1 // pred_check
      _
    $region23: #{tpu_custom_call.1} parent=1 // pred_check_branch
      %134 = sbr.rel (0) target = $region25
    $region24: #{tpu_custom_call.1} parent=1 // pred_region
      %s136 = ssub.s32 128, 128
      %137 = vsyncadd [#allocation4], %s136
      %s139 = sshll.u32 [#allocation7], 4
      %s140 = int_to_ptr.vmem [resolvable:$true] %s139
      %142 = dma.vmem_to_hbm [thread:$0]  %s140, 128, %s3, [#allocation4]
    $region25: #{tpu_custom_call.1} parent=1 // pred_fallthru
      _
    // Predicated region
    $region26: #{tpu_custom_call.1} parent=1 // pred_check
      _
    $region27: #{tpu_custom_call.1} parent=1 // pred_check_branch
      %144 = sbr.rel (0) target = $region29
    $region28: #{tpu_custom_call.1} parent=1 // pred_region
      %145 = dma.done [#allocation4], 128
    $region29: #{tpu_custom_call.1} parent=1 // pred_fallthru
      _
    %146 = vsyncpa [#allocation3], 1
    %147 = vsyncpa [#allocation6], 1
    %148 = vsyncpa [#allocation4], 1

</llo_original>
